<compile_context>
chip_gen: v7x
topology: tpu7x:2x2x1
jax: 0.10.0
libtpu: 0.0.40
codegen_flags: <defaults>
</compile_context>

<pallas_src>
import jax
import jax.numpy as jnp
from jax.experimental import pallas as pl
from jax.experimental.pallas import tpu as pltpu


def sphere_sdf_kernel(params_ref, x_ref, o_ref):
    # params_ref: SMEM (4,) f32  [cx, cy, cz, radius]
    # x_ref:      VMEM (3, TILE) f32   (coordinate rows, lane-dense points)
    # o_ref:      VMEM (1, TILE) f32
    cx = params_ref[0]
    cy = params_ref[1]
    cz = params_ref[2]
    r = params_ref[3]

    dx = x_ref[0:1, :] - cx          # (1, TILE) full-width VALU ops
    dy = x_ref[1:2, :] - cy
    dz = x_ref[2:3, :] - cz
    sq = dx * dx + dy * dy + dz * dz
    o_ref[...] = jnp.sqrt(sq) - r


def sphere_sdf(x, center, radius, *, tile_n=16384):
    """x: (N, 3), center: (3,), radius: scalar  ->  (N, 1) signed distance."""
    N, D = x.shape
    assert D == 3

    # Lane-dense layout: (3, N), f32.
    xt = jnp.asarray(x, jnp.float32).T                      # (3, N)

    # Pack center + radius into one SMEM scalar vector.
    params = jnp.concatenate(
        [jnp.asarray(center, jnp.float32).reshape(3),
         jnp.asarray(radius, jnp.float32).reshape(1)])      # (4,)

    # Tile on the lane axis; pad N up so every block is full (no masking).
    lane = 128
    tile = max(lane, (int(tile_n) // lane) * lane)           # multiple of 128
    n_pad128 = pl.cdiv(N, lane) * lane
    tile = min(tile, n_pad128)
    n_total = pl.cdiv(n_pad128, tile) * tile
    if n_total != N:
        xt = jnp.pad(xt, ((0, 0), (0, n_total - N)))
    grid = (n_total // tile,)

    out = pl.pallas_call(
        sphere_sdf_kernel,
        out_shape=jax.ShapeDtypeStruct((1, n_total), jnp.float32),
        grid_spec=pl.GridSpec(
            grid=grid,
            in_specs=[
                # center/radius as SMEM scalars (whole array, no tiling).
                pl.BlockSpec(memory_space=pltpu.MemorySpace.SMEM),
                # points: (3, tile) block, lane-dense.
                pl.BlockSpec((3, tile), lambda i: (0, i)),
            ],
            # lane-dense output slab: unmasked full-width stores.
            out_specs=pl.BlockSpec((1, tile), lambda i: (0, i)),
        ),
        compiler_params=pltpu.CompilerParams(
            dimension_semantics=("parallel",),
            vmem_limit_bytes=32 * 1024 * 1024,
        ),
    )(params, xt)

    # Back to the PyTorch output shape (N, 1); drop padded lanes.
    return out[:, :N].T


if __name__ == "__main__":
    key = jax.random.PRNGKey(0)

    # Deterministic "parameters" (nn.Parameter(center), nn.Parameter(radius)).
    center = jnp.asarray([0.25, -0.1, 0.5], dtype=jnp.float32)
    radius = jnp.float32(1.0)

    # Two cases: small aligned N (single block) and a non-multiple-of-128 N
    # with a small tile to exercise the multi-block + padding path.
    for N, tile in [(256, 16384), (4099, 512)]:
        kx = jax.random.fold_in(key, N)
        x = jax.random.normal(kx, (N, 3), dtype=jnp.float32)

        out = jax.block_until_ready(sphere_sdf(x, center, radius, tile_n=tile))

        ref = jnp.linalg.norm(x - center[None, :], axis=-1, keepdims=True) - radius
        assert out.shape == (N, 1)
        assert jnp.max(jnp.abs(out - ref)) < 1e-5

    print("KERNEL_OK")
</pallas_src>

<mosaic_0001>
module attributes {stable_mosaic.version = 11 : i64} {
  func.func @sphere_sdf_kernel(%arg0: i32, %arg1: memref<4xf32, #tpu.memory_space<smem>>, %arg2: memref<3x256xf32, #tpu.memory_space<vmem>>, %arg3: memref<1x256xf32, #tpu.memory_space<vmem>>) attributes {dimension_semantics = [#tpu.dimension_semantics<parallel>], iteration_bounds = array<i64: 1>, scalar_prefetch = 0 : i64, scratch_operands = 0 : i64, tpu.core_type = #tpu.core_type<tc>, window_params = [{transform_indices = @transform_0, window_bounds = array<i64: 4>}, {transform_indices = @transform_1, window_bounds = array<i64: 3, 256>}, {transform_indices = @transform_2, window_bounds = array<i64: 1, 256>}]} {
    %c0 = arith.constant 0 : index
    %0 = memref.load %arg1[%c0] : memref<4xf32, #tpu.memory_space<smem>>
    %c1 = arith.constant 1 : index
    %1 = memref.load %arg1[%c1] : memref<4xf32, #tpu.memory_space<smem>>
    %c2 = arith.constant 2 : index
    %2 = memref.load %arg1[%c2] : memref<4xf32, #tpu.memory_space<smem>>
    %c3 = arith.constant 3 : index
    %3 = memref.load %arg1[%c3] : memref<4xf32, #tpu.memory_space<smem>>
    %c0_0 = arith.constant 0 : index
    %c0_1 = arith.constant 0 : index
    %4 = vector.load %arg2[%c0_0, %c0_1] : memref<3x256xf32, #tpu.memory_space<vmem>>, vector<1x256xf32>
    %5 = vector.broadcast %0 : f32 to vector<1x256xf32>
    %6 = arith.subf %4, %5 : vector<1x256xf32>
    %c1_2 = arith.constant 1 : index
    %c0_3 = arith.constant 0 : index
    %7 = vector.load %arg2[%c1_2, %c0_3] : memref<3x256xf32, #tpu.memory_space<vmem>>, vector<1x256xf32>
    %8 = vector.broadcast %1 : f32 to vector<1x256xf32>
    %9 = arith.subf %7, %8 : vector<1x256xf32>
    %c2_4 = arith.constant 2 : index
    %c0_5 = arith.constant 0 : index
    %10 = vector.load %arg2[%c2_4, %c0_5] : memref<3x256xf32, #tpu.memory_space<vmem>>, vector<1x256xf32>
    %11 = vector.broadcast %2 : f32 to vector<1x256xf32>
    %12 = arith.subf %10, %11 : vector<1x256xf32>
    %13 = arith.mulf %6, %6 : vector<1x256xf32>
    %14 = arith.mulf %9, %9 : vector<1x256xf32>
    %15 = arith.addf %13, %14 : vector<1x256xf32>
    %16 = arith.mulf %12, %12 : vector<1x256xf32>
    %17 = arith.addf %15, %16 : vector<1x256xf32>
    %18 = math.sqrt %17 : vector<1x256xf32>
    %19 = vector.broadcast %3 : f32 to vector<1x256xf32>
    %20 = arith.subf %18, %19 : vector<1x256xf32>
    %c0_6 = arith.constant 0 : index
    %c0_7 = arith.constant 0 : index
    %21 = vector.load %arg3[%c0_6, %c0_7] : memref<1x256xf32, #tpu.memory_space<vmem>>, vector<1x256xf32>
    tpu.vector_store %arg3[%c0_6, %c0_7], %20 {strides = array<i32>} : memref<1x256xf32, #tpu.memory_space<vmem>>, vector<1x256xf32>,
    return
  }
  func.func @transform_0(%arg0: i32) -> i32 {
    %c0_i32 = arith.constant 0 : i32
    %c0_i32_0 = arith.constant 0 : i32
    return %c0_i32 : i32
  }
  func.func @transform_1(%arg0: i32) -> (i32, i32) {
    %c0_i32 = arith.constant 0 : i32
    %c0_i32_0 = arith.constant 0 : i32
    return %c0_i32, %arg0 : i32, i32
  }
  func.func @transform_2(%arg0: i32) -> (i32, i32) {
    %c0_i32 = arith.constant 0 : i32
    %c0_i32_0 = arith.constant 0 : i32
    return %c0_i32, %arg0 : i32, i32
  }
}

</mosaic_0001>

<llo_original>
// kernel: tpu_custom_call.1
$region0: #{tpu_custom_call.1}
  #allocation0 [shape = 'u32[]', space=smem, size = 0x4, offset = 0x4, fixed_abs, tag = 'smem constant byte address 0x4 - core index']
  #allocation1 [shape = 'u32[144,128]{1,0:T(1,128)}', space=vmem, size = 0x12000, scoped, tag = 'internal scratch']
  %s0 = inlined_call_operand.hbm [shape: f32[4], index: 0, kind: input, shape index: {}]
  %s1 = inlined_call_operand.hbm [shape: f32[3,256], index: 1, kind: input, shape index: {}]
  %s2 = inlined_call_operand.hbm [shape: f32[1,256], index: 2, kind: output, shape index: {}]
  %s3 = sld [smem:[#allocation0]]
  $region26: #{tpu_custom_call.1} parent=0
    _
  %s5 = ssub.s32 1, %s3
  %s6 = scalar_select 0, %s5, %s3
  $region1: #{tpu_custom_call.1} parent=0
    #allocation2 [shape = 'u8[512]{0}', space=smem, size = 0x200, scoped, tag = 'input window, operand 0, single buffered']
    #allocation3 [shape = 's32[1]{0}', space=sflag, size = 0x4, scoped, tag = 'scoped memory for tpu_custom_call.1']
    #allocation4 [shape = 's32[1]{0}', space=sflag, size = 0x4, scoped, tag = 'scoped memory for tpu_custom_call.1']
    #allocation5 [shape = 's32[1]{0}', space=sflag, size = 0x4, scoped, tag = 'scoped memory for tpu_custom_call.1']
    #allocation6 [shape = 'u8[4096]{0}', space=vmem, size = 0x1000, scoped, tag = 'input window, operand 1, single buffered']
    #allocation7 [shape = 'u8[1024]{0}', space=vmem, size = 0x400, scoped, tag = 'output window, operand 0, single buffered']
    %7 = vsyncpa [#allocation5], 0
    %8 = vsyncpa [#allocation3], 0
    %9 = vsyncpa [#allocation4], 0
    // Predicated region
    $region2: #{tpu_custom_call.1} parent=1 // pred_check
      _
    $region3: #{tpu_custom_call.1} parent=1 // pred_check_branch
      %11 = sbr.rel (0) target = $region5
    $region4: #{tpu_custom_call.1} parent=1 // pred_region
      %s13 = ssub.s32 16, 16
      %14 = vsyncadd [#allocation5], %s13
      %17 = dma.hbm_to_smem %s0, 16, [#allocation2], [#allocation5]
    $region5: #{tpu_custom_call.1} parent=1 // pred_fallthru
      _
    // Predicated region
    $region6: #{tpu_custom_call.1} parent=1 // pred_check
      _
    $region7: #{tpu_custom_call.1} parent=1 // pred_check_branch
      %19 = sbr.rel (0) target = $region9
    $region8: #{tpu_custom_call.1} parent=1 // pred_region
      %s21 = ssub.s32 128, 128
      %22 = vsyncadd [#allocation3], %s21
      %s24 = sshll.u32 [#allocation6], 4
      %s25 = int_to_ptr.vmem [resolvable:$true] %s24
      %27 = dma.hbm_to_vmem [thread:$0]  %s1, 128, %s25, [#allocation3]
    $region9: #{tpu_custom_call.1} parent=1 // pred_fallthru
      _
    // Predicated region
    $region10: #{tpu_custom_call.1} parent=1 // pred_check
      _
    $region11: #{tpu_custom_call.1} parent=1 // pred_check_branch
      %29 = sbr.rel (0) target = $region13
    $region12: #{tpu_custom_call.1} parent=1 // pred_region
      %30 = dma.done [#allocation5], 16
    $region13: #{tpu_custom_call.1} parent=1 // pred_fallthru
      _
    // Predicated region
    $region14: #{tpu_custom_call.1} parent=1 // pred_check
      _
    $region15: #{tpu_custom_call.1} parent=1 // pred_check_branch
      %32 = sbr.rel (0) target = $region17
    $region16: #{tpu_custom_call.1} parent=1 // pred_region
      %33 = dma.done [#allocation3], 128
    $region17: #{tpu_custom_call.1} parent=1 // pred_fallthru
      _
    %34 = sfence
    %s35 = sld [smem:[#allocation2]]
    %s36 = sld [smem:[#allocation2 + $0x1]]
    %s37 = sld [smem:[#allocation2 + $0x2]]
    %s38 = sld [smem:[#allocation2 + $0x3]]
    %v39 = vld [vmem:[#allocation6] ss:$4 sm:$0x3]
    %v40 = vstv %s35
    %v41 = vsub.f32 %v39, %v40
    %s42 = scalar_lea.vmem [#allocation6], 1
    %v43 = vld [vmem:[%s42] ss:$4 sm:$0x3]
    %v44 = vstv %s36
    %v45 = vsub.f32 %v43, %v44
    %s46 = scalar_lea.vmem [#allocation6], 2
    %v47 = vld [vmem:[%s46] ss:$4 sm:$0x3]
    %v48 = vstv %s37
    %v49 = vsub.f32 %v47, %v48
    %v50 = vmul.f32 %v41, %v41
    %v51 = vmul.f32 %v45, %v45
    %v52 = vadd.f32 %v50, %v51
    %v53 = vmul.f32 %v49, %v49
    %v54 = vadd.f32 %v52, %v53
    %v55 = vrsqrt.pop %v54
    %v56 = vmul.f32 %v54, %v55
    %vm57 = vcmp.eq.f32.partialorder %v54, inf
    %v58 = vsel %vm57, %v54, %v56
    %vm59 = vcmp.eq.f32.partialorder %v54, 0.0
    %v60 = vand.u32 %v54, 2147483648
    %v61 = vsel %vm59, %v60, %v58
    %v62 = vstv %s38
    %v63 = vsub.f32 %v61, %v62
    %v64 = vlaneseq
    %vm65 = vcmp.ge.s32.totalorder %v64, 0
    %vm66 = vcmp.lt.s32.totalorder %v64, 256
    %vm67 = vmand %vm65, %vm66
    %68 = vst.msk [vmem:[#allocation7] sm:$0x3] %vm67, %v63
    // Predicated region
    $region18: #{tpu_custom_call.1} parent=1 // pred_check
      _
    $region19: #{tpu_custom_call.1} parent=1 // pred_check_branch
      %70 = sbr.rel (0) target = $region21
    $region20: #{tpu_custom_call.1} parent=1 // pred_region
      %s72 = ssub.s32 32, 32
      %73 = vsyncadd [#allocation4], %s72
      %s75 = sshll.u32 [#allocation7], 4
      %s76 = int_to_ptr.vmem [resolvable:$true] %s75
      %78 = dma.vmem_to_hbm [thread:$0]  %s76, 32, %s2, [#allocation4]
    $region21: #{tpu_custom_call.1} parent=1 // pred_fallthru
      _
    // Predicated region
    $region22: #{tpu_custom_call.1} parent=1 // pred_check
      _
    $region23: #{tpu_custom_call.1} parent=1 // pred_check_branch
      %80 = sbr.rel (0) target = $region25
    $region24: #{tpu_custom_call.1} parent=1 // pred_region
      %81 = dma.done [#allocation4], 32
    $region25: #{tpu_custom_call.1} parent=1 // pred_fallthru
      _
    %82 = vsyncpa [#allocation3], 1
    %83 = vsyncpa [#allocation4], 1
    %84 = vsyncpa [#allocation5], 1

</llo_original>
